<compile_context>
chip_gen: v7x
topology: tpu7x:2x2x1
jax: 0.10.0
libtpu: 0.0.40
codegen_flags: <defaults>
</compile_context>

<pallas_src>
import functools

import jax
import jax.numpy as jnp
import numpy as np
from jax.experimental import pallas as pl
from jax.experimental.pallas import tpu as pltpu


# ---------------------------------------------------------------------------
# Kernel: pure elementwise byte select on identically shaped uint8 tiles.
# mask bytes are 0x00 (keep img) or 0xFF (take ref), so the select is three
# bitwise ops — no compare, no bool mask, no cross-sublane broadcast.
# ---------------------------------------------------------------------------
def _mix_patch_kernel(img_ref, ref_ref, mask_ref, out_ref):
    m = mask_ref[...]
    out_ref[...] = (ref_ref[...] & m) | (img_ref[...] & ~m)


def _round_up(x, m):
    return (x + m - 1) // m * m


def _cores_per_chip():
    """Best-effort detection of two-TensorCore (megacore) chips; 1 on failure."""
    try:
        kind = jax.devices()[0].device_kind.lower()
    except Exception:
        return 1
    return 2 if any(tag in kind for tag in ("v4", "v5p", "v7")) else 1


def _pick_lane_width(per_image_bytes, target=8192):
    """Largest multiple-of-128 divisor of per_image_bytes that is <= target
    (lane-dense rows -> unmasked vector stores).  Falls back gracefully for
    odd image sizes."""
    mult128 = [d for d in range(128, per_image_bytes + 1, 128)
               if per_image_bytes % d == 0]
    if mult128:
        le = [d for d in mult128 if d <= target]
        return max(le) if le else min(mult128)
    divs = [d for d in range(1, per_image_bytes + 1) if per_image_bytes % d == 0]
    le = [d for d in divs if d <= target]
    return max(le) if le else per_image_bytes


def _pick_row_block(rows, lane_width, budget_bytes, cores):
    """Largest legal divisor of `rows` whose *padded*, 4-stream,
    double-buffered VMEM footprint fits `budget_bytes`.  On two-core chips
    prefer an even step count >= 2 as long as the block stays within 4x of
    the largest fitting block (balanced sharding + DMA/compute overlap)."""

    def padded_bytes(br):
        # uint8 native tile is (32, 128): pad both block dims before counting.
        return _round_up(br, 32) * _round_up(lane_width, 128)

    def fits(br):
        return 4 * 2 * padded_bytes(br) <= budget_bytes  # 4 streams, 2 buffers

    divisors = [d for d in range(1, rows + 1) if rows % d == 0]
    # Mosaic tiling rule: the row (sublane) block dim must be a multiple of 8
    # or equal to the full extent.
    legal = [d for d in divisors if d % 8 == 0 or d == rows]
    good = [d for d in legal if fits(d)] or [min(legal)]
    best = max(good)
    if cores > 1:
        pref = [d for d in good
                if (rows // d) >= 2 and (rows // d) % 2 == 0
                and 4 * padded_bytes(d) >= padded_bytes(best)]
        if pref:
            best = max(pref)
    return best


@functools.partial(jax.jit,
                   static_argnames=("patch_size", "vmem_block_budget_bytes"))
def mix_patch(img, ref, mix_mask, patch_size, *,
              vmem_block_budget_bytes=16 * 1024 * 1024):
    """Batched MixPatch.forward.

    img, ref : (B, S, S, 3) uint8
    mix_mask : (B, (S // patch_size) ** 2), nonzero => take the ref patch
    returns  : (B, S, S, 3) uint8 mixed images
    """
    if img.dtype != jnp.uint8 or ref.dtype != jnp.uint8:
        raise TypeError(f"mix_patch expects uint8 images, got {img.dtype}/{ref.dtype}")
    if img.ndim != 4 or img.shape != ref.shape or img.shape[-1] != 3:
        raise ValueError(f"expected (B, S, S, 3) images, got {img.shape} / {ref.shape}")
    B, S, S2, _ = img.shape
    if S != S2 or S % patch_size != 0:
        raise ValueError(f"image {S}x{S2} not divisible into {patch_size}px patches")
    h = S // patch_size
    n_patches = h * h
    if mix_mask.shape != (B, n_patches):
        raise ValueError(f"mix_mask must have shape ({B}, {n_patches}), got {mix_mask.shape}")

    # --- pre-expand the per-patch mask to a 0x00/0xFF pixel mask (uint8) ----
    m_patch = mix_mask.reshape(B, h, h) != 0
    m_rows = jnp.repeat(m_patch, patch_size, axis=1)                  # (B, S, h)
    m_pix = jnp.repeat(m_rows, patch_size, axis=2)                    # (B, S, S)
    mask_u8 = jnp.where(m_pix, jnp.uint8(0xFF), jnp.uint8(0x00))
    mask_u8 = jnp.broadcast_to(mask_u8[..., None], (B, S, S, 3))      # (B, S, S, 3)

    # --- flatten everything (contiguous, free) to a lane-dense 2-D view -----
    per_image_bytes = S * S * 3
    lane_w = _pick_lane_width(per_image_bytes)
    rows = B * per_image_bytes // lane_w

    img2 = img.reshape(rows, lane_w)
    ref2 = ref.reshape(rows, lane_w)
    msk2 = mask_u8.reshape(rows, lane_w)

    cores = _cores_per_chip()
    br = _pick_row_block(rows, lane_w, vmem_block_budget_bytes, cores)
    grid = (rows // br,)

    spec = pl.BlockSpec((br, lane_w), lambda i: (i, 0))
    out2 = pl.pallas_call(
        _mix_patch_kernel,
        out_shape=jax.ShapeDtypeStruct((rows, lane_w), jnp.uint8),
        grid=grid,
        in_specs=[spec, spec, spec],
        out_specs=spec,
        compiler_params=pltpu.CompilerParams(
            dimension_semantics=("parallel",),
            vmem_limit_bytes=32 * 1024 * 1024,
        ),
    )(img2, ref2, msk2)

    return out2.reshape(B, S, S, 3)


if __name__ == "__main__":
    batch = 8
    input_size = 32
    patch_size = 8
    mix_rate = 0.5
    h = input_size // patch_size
    n = h * h

    key = jax.random.PRNGKey(0)
    k_img, k_ref, k_perm = jax.random.split(key, 3)

    # Deterministic "PIL-like" uint8 images.
    img = jax.random.randint(k_img, (batch, input_size, input_size, 3), 0, 256,
                             dtype=jnp.int32).astype(jnp.uint8)
    ref = jax.random.randint(k_ref, (batch, input_size, input_size, 3), 0, 256,
                             dtype=jnp.int32).astype(jnp.uint8)

    # Deterministic stand-in for the module's host-side np.random.shuffle(mix_idx).
    # TODO(synk): PIL file open/convert/resize, Image.fromarray, and the host
    # RNG shuffle stay outside the kernel (host-side I/O / RNG).
    base = jnp.zeros((n,), jnp.float32).at[: int(n * mix_rate)].set(1.0)
    perm_keys = jax.random.split(k_perm, batch)
    mix_mask = jnp.stack([jax.random.permutation(k, base) for k in perm_keys])

    out = mix_patch(img, ref, mix_mask, patch_size=patch_size)
    out = jax.block_until_ready(out)

    # numpy reference replicating MixPatch.forward exactly, per image.
    def ref_mix_one(img_a, ref_a, mask_a):
        P = patch_size
        a = np.asarray(img_a).reshape(h, P, h, P, 3)
        b = np.asarray(ref_a).reshape(h, P, h, P, 3)
        a = np.einsum("hpwqc->hwpqc", a).reshape(n, P, P, 3)
        b = np.einsum("hpwqc->hwpqc", b).reshape(n, P, P, 3)
        m = np.asarray(mask_a).astype(bool)
        mixed = np.where(m[:, None, None, None], b, a)
        mixed = mixed.reshape(h, h, P, P, 3)
        mixed = np.einsum("hwpqc->hpwqc", mixed).reshape(input_size, input_size, 3)
        return np.clip(mixed, 0, 255).astype(np.uint8)

    expected = np.stack([ref_mix_one(img[i], ref[i], mix_mask[i]) for i in range(batch)])
    assert np.array_equal(np.asarray(out), expected), "mismatch vs numpy reference"
    print("KERNEL_OK")
</pallas_src>

<mosaic_0001>
module attributes {stable_mosaic.version = 11 : i64} {
  func.func @_mix_patch_kernel(%arg0: i32, %arg1: memref<8x3072xi8, #tpu.memory_space<vmem>>, %arg2: memref<8x3072xi8, #tpu.memory_space<vmem>>, %arg3: memref<8x3072xi8, #tpu.memory_space<vmem>>, %arg4: memref<8x3072xi8, #tpu.memory_space<vmem>>) attributes {dimension_semantics = [#tpu.dimension_semantics<parallel>], iteration_bounds = array<i64: 1>, scalar_prefetch = 0 : i64, scratch_operands = 0 : i64, tpu.core_type = #tpu.core_type<tc>, window_params = [{transform_indices = @transform_0, window_bounds = array<i64: 8, 3072>}, {transform_indices = @transform_1, window_bounds = array<i64: 8, 3072>}, {transform_indices = @transform_2, window_bounds = array<i64: 8, 3072>}, {transform_indices = @transform_3, window_bounds = array<i64: 8, 3072>}]} {
    %c0 = arith.constant 0 : index
    %c0_0 = arith.constant 0 : index
    %0 = vector.load %arg3[%c0, %c0_0] : memref<8x3072xi8, #tpu.memory_space<vmem>>, vector<8x3072xi8>
    %c0_1 = arith.constant 0 : index
    %c0_2 = arith.constant 0 : index
    %1 = vector.load %arg2[%c0_1, %c0_2] : memref<8x3072xi8, #tpu.memory_space<vmem>>, vector<8x3072xi8>
    %2 = arith.andi %1, %0 : vector<8x3072xi8>
    %c0_3 = arith.constant 0 : index
    %c0_4 = arith.constant 0 : index
    %3 = vector.load %arg1[%c0_3, %c0_4] : memref<8x3072xi8, #tpu.memory_space<vmem>>, vector<8x3072xi8>
    %cst = arith.constant dense<-1> : vector<8x3072xi8>
    %4 = arith.xori %0, %cst : vector<8x3072xi8>
    %5 = arith.andi %3, %4 : vector<8x3072xi8>
    %6 = arith.ori %2, %5 : vector<8x3072xi8>
    %c0_5 = arith.constant 0 : index
    %c0_6 = arith.constant 0 : index
    %7 = vector.load %arg4[%c0_5, %c0_6] : memref<8x3072xi8, #tpu.memory_space<vmem>>, vector<8x3072xi8>
    tpu.vector_store %arg4[%c0_5, %c0_6], %6 {strides = array<i32>} : memref<8x3072xi8, #tpu.memory_space<vmem>>, vector<8x3072xi8>,
    return
  }
  func.func @transform_0(%arg0: i32) -> (i32, i32) {
    %c0_i32 = arith.constant 0 : i32
    %c0_i32_0 = arith.constant 0 : i32
    return %arg0, %c0_i32 : i32, i32
  }
  func.func @transform_1(%arg0: i32) -> (i32, i32) {
    %c0_i32 = arith.constant 0 : i32
    %c0_i32_0 = arith.constant 0 : i32
    return %arg0, %c0_i32 : i32, i32
  }
  func.func @transform_2(%arg0: i32) -> (i32, i32) {
    %c0_i32 = arith.constant 0 : i32
    %c0_i32_0 = arith.constant 0 : i32
    return %arg0, %c0_i32 : i32, i32
  }
  func.func @transform_3(%arg0: i32) -> (i32, i32) {
    %c0_i32 = arith.constant 0 : i32
    %c0_i32_0 = arith.constant 0 : i32
    return %arg0, %c0_i32 : i32, i32
  }
}

</mosaic_0001>

<llo_original>
// kernel: mix_patch.1
$region0: #{mix_patch.1}
  #allocation0 [shape = 'u32[]', space=smem, size = 0x4, offset = 0x4, fixed_abs, tag = 'smem constant byte address 0x4 - core index']
  #allocation1 [shape = 'u32[144,128]{1,0:T(1,128)}', space=vmem, size = 0x12000, scoped, tag = 'internal scratch']
  %s0 = inlined_call_operand.vmem [shape: u8[8,3072], index: 0, kind: input, shape index: {}]
  %s1 = inlined_call_operand.vmem [shape: u8[8,3072], index: 1, kind: input, shape index: {}]
  %s2 = inlined_call_operand.vmem [shape: u8[8,3072], index: 2, kind: input, shape index: {}]
  %s3 = inlined_call_operand.vmem [shape: u8[8,3072], index: 3, kind: output, shape index: {}]
  %s4 = sld [smem:[#allocation0]]
  $region22: #{mix_patch.1} parent=0
    _
  %s6 = ssub.s32 1, %s4
  %s7 = scalar_select 0, %s6, %s4
  // Predicated region
  $region2: #{mix_patch.1} parent=0 // pred_check
    _
  $region3: #{mix_patch.1} parent=0 // pred_check_branch
    %9 = sbr.rel (0) target = $region5
  $region4: #{mix_patch.1} parent=0 // pred_region
    _
  $region5: #{mix_patch.1} parent=0 // pred_fallthru
    _
  // Predicated region
  $region6: #{mix_patch.1} parent=0 // pred_check
    _
  $region7: #{mix_patch.1} parent=0 // pred_check_branch
    %11 = sbr.rel (0) target = $region9
  $region8: #{mix_patch.1} parent=0 // pred_region
    _
  $region9: #{mix_patch.1} parent=0 // pred_fallthru
    _
  // Predicated region
  $region10: #{mix_patch.1} parent=0 // pred_check
    _
  $region11: #{mix_patch.1} parent=0 // pred_check_branch
    %13 = sbr.rel (0) target = $region13
  $region12: #{mix_patch.1} parent=0 // pred_region
    _
  $region13: #{mix_patch.1} parent=0 // pred_fallthru
    _
  %v15 = vld [vmem:[%s2] sm:$0xff]
  %v16 = vld [vmem:[%s2 + $0x8] sm:$0xff]
  %v17 = vld [vmem:[%s2 + $0x10] sm:$0xff]
  %v18 = vld [vmem:[%s2 + $0x18] sm:$0xff]
  %v19 = vld [vmem:[%s2 + $0x20] sm:$0xff]
  %v20 = vld [vmem:[%s2 + $0x28] sm:$0xff]
  %v21 = vld [vmem:[%s1] sm:$0xff]
  %v22 = vld [vmem:[%s1 + $0x8] sm:$0xff]
  %v23 = vld [vmem:[%s1 + $0x10] sm:$0xff]
  %v24 = vld [vmem:[%s1 + $0x18] sm:$0xff]
  %v25 = vld [vmem:[%s1 + $0x20] sm:$0xff]
  %v26 = vld [vmem:[%s1 + $0x28] sm:$0xff]
  %v27 = vand.u32 %v21, %v15
  %v28 = vand.u32 %v22, %v16
  %v29 = vand.u32 %v23, %v17
  %v30 = vand.u32 %v24, %v18
  %v31 = vand.u32 %v25, %v19
  %v32 = vand.u32 %v26, %v20
  %v33 = vld [vmem:[%s0] sm:$0xff]
  %v34 = vld [vmem:[%s0 + $0x8] sm:$0xff]
  %v35 = vld [vmem:[%s0 + $0x10] sm:$0xff]
  %v36 = vld [vmem:[%s0 + $0x18] sm:$0xff]
  %v37 = vld [vmem:[%s0 + $0x20] sm:$0xff]
  %v38 = vld [vmem:[%s0 + $0x28] sm:$0xff]
  %v39 = vxor.u32 %v15, 4294967295
  %v40 = vxor.u32 %v16, 4294967295
  %v41 = vxor.u32 %v17, 4294967295
  %v42 = vxor.u32 %v18, 4294967295
  %v43 = vxor.u32 %v19, 4294967295
  %v44 = vxor.u32 %v20, 4294967295
  %v45 = vand.u32 %v33, %v39
  %v46 = vand.u32 %v34, %v40
  %v47 = vand.u32 %v35, %v41
  %v48 = vand.u32 %v36, %v42
  %v49 = vand.u32 %v37, %v43
  %v50 = vand.u32 %v38, %v44
  %v51 = vor.u32 %v27, %v45
  %v52 = vor.u32 %v28, %v46
  %v53 = vor.u32 %v29, %v47
  %v54 = vor.u32 %v30, %v48
  %v55 = vor.u32 %v31, %v49
  %v56 = vor.u32 %v32, %v50
  %57 = vst [vmem:[%s3] sm:$0xff] %v51
  %58 = vst [vmem:[%s3 + $0x8] sm:$0xff] %v52
  %59 = vst [vmem:[%s3 + $0x10] sm:$0xff] %v53
  %60 = vst [vmem:[%s3 + $0x18] sm:$0xff] %v54
  %61 = vst [vmem:[%s3 + $0x20] sm:$0xff] %v55
  %62 = vst [vmem:[%s3 + $0x28] sm:$0xff] %v56
  // Predicated region
  $region14: #{mix_patch.1} parent=0 // pred_check
    _
  $region15: #{mix_patch.1} parent=0 // pred_check_branch
    %64 = sbr.rel (0) target = $region17
  $region16: #{mix_patch.1} parent=0 // pred_region
    _
  $region17: #{mix_patch.1} parent=0 // pred_fallthru
    _
  // Predicated region
  $region18: #{mix_patch.1} parent=0 // pred_check
    _
  $region19: #{mix_patch.1} parent=0 // pred_check_branch
    %66 = sbr.rel (0) target = $region21
  $region20: #{mix_patch.1} parent=0 // pred_region
    _
  $region21: #{mix_patch.1} parent=0 // pred_fallthru
    _

</llo_original>
